<compile_context>
chip_gen: v7x
topology: tpu7x:2x2x1
jax: 0.10.0
libtpu: 0.0.40
codegen_flags: <defaults>
</compile_context>

<pallas_src>
import jax
import jax.numpy as jnp
from jax.experimental import pallas as pl
from jax.experimental.pallas import tpu as pltpu


def _row_sum(x):
    """Sum a (TB, ...) tile over all trailing axes -> (TB, 1)."""
    while x.ndim > 2:
        x = jnp.sum(x, axis=-1)
    return jnp.sum(x, axis=-1, keepdims=True)


def _make_kernel(gamma, has_next):
    """Kernel factory: specialises on gamma and on whether target_next exists."""

    def kernel(*refs):
        if has_next:
            nn_ref, tgt_ref, tnx_ref, out_ref = refs
        else:
            nn_ref, tgt_ref, out_ref = refs

        x = nn_ref[...].astype(jnp.float32)                  # (TB, S, F)
        tgt_abs = jnp.abs(tgt_ref[...].astype(jnp.float32))
        if has_next:
            diff = jnp.abs(tnx_ref[...].astype(jnp.float32)) - tgt_abs
        else:
            diff = -tgt_abs                                   # |zeros| - |target|

        abs_x = jnp.abs(x)
        signs = jnp.tanh(gamma * x)                           # EUP transcendental

        # v_i_caps * diff * signs == (|nn| * signs * diff) / s_b: the full-tile
        # divide cancels; one divide per batch row remains.
        num = _row_sum(abs_x * signs * diff)                  # (TB, 1)
        den = _row_sum(abs_x)                                 # (TB, 1)

        # Exact divide kept deliberately: it only touches TB values per step and
        # approx vrcp's relative error would be visible at the test tolerances.
        # NOTE: den == 0 (an all-zero batch row) yields NaN, matching the PyTorch
        # reference's divide-by-zero behaviour; no batch padding is ever added,
        # so no artificial NaN rows are introduced.
        per_row = num / den                                   # (TB, 1)

        # One scalar per grid step -> (1, 1, 1) block.
        out_ref[...] = jnp.sum(per_row, axis=0, keepdims=True)[:, :, None]

    return kernel


def _padded_row_bytes(S, F, dtype):
    """VMEM bytes one batch row of one input stream occupies after Mosaic's
    (sublane, lane) padding of the minor two dims (dtype-aware)."""
    itemsize = jnp.dtype(dtype).itemsize
    sub_tile = {4: 8, 2: 16, 1: 32}.get(itemsize, 8)   # native tile rows per dtype
    s_pad = -(-S // sub_tile) * sub_tile
    f_pad = -(-F // 128) * 128
    return s_pad * f_pad * itemsize


def _choose_tb(batch, per_row_bytes, budget_bytes=8 << 20):
    """Batch rows per grid step.

    * Double-buffered input streams (+ the tiny per-step scalar output block)
      must fit `budget_bytes`; the rest of the 32 MiB vmem limit is left for the
      in-kernel f32-upcast temporaries each elementwise op may materialize.
    * Never collapse the grid to one step when avoidable (>=2 steps, >=4 once
      batch >= 8) so DMA/compute overlap survives and v7x megacore can shard the
      "parallel" axis; prefer an even step count for balanced sharding.
    * Otherwise take the largest TB (largest DMAs, fewest 0.35 us step overheads).
      TB is a leading block dim (minor dims are the full (S, F)), so no sublane
      alignment constraint applies to it.
    """
    out_overhead = 2 * 4096                        # double-buffered (1,1,1) tile
    cap = max(1, (budget_bytes - out_overhead) // (2 * per_row_bytes))
    divisors = [d for d in range(1, batch + 1) if batch % d == 0 and d <= cap]
    min_steps = 1 if batch == 1 else (2 if batch < 8 else 4)
    cands = [d for d in divisors if batch // d >= min_steps] or divisors
    even = [d for d in cands if (batch // d) % 2 == 0]
    cands = even or cands
    return max(cands)


def soft_stock_loss(nn_output, target, target_next=None, gamma=5.0):
    """Pallas wrapper. nn_output/target[/target_next]: (B, S, F); returns scalar.

    Inputs are consumed in their given dtype (bf16 passes straight through and
    halves HBM traffic); compute is done in f32 inside the kernel.
    """
    B, S, F = nn_output.shape
    assert target.shape == (B, S, F)

    inputs = [nn_output, target]
    has_next = target_next is not None
    if has_next:
        assert target_next.shape == (B, S, F)
        inputs.append(target_next)

    per_row_bytes = sum(_padded_row_bytes(S, F, x.dtype) for x in inputs)
    TB = _choose_tb(B, per_row_bytes)
    G = B // TB

    in_specs = [pl.BlockSpec((TB, S, F), lambda i: (i, 0, 0)) for _ in inputs]
    # One scalar per grid step; minor-two block dims equal the full array dims so
    # the tiling is trivially legal and costs a single padded tile per step.
    out_specs = pl.BlockSpec((1, 1, 1), lambda i: (i, 0, 0))

    partials = pl.pallas_call(
        _make_kernel(float(gamma), has_next),
        out_shape=jax.ShapeDtypeStruct((G, 1, 1), jnp.float32),
        grid_spec=pltpu.PrefetchScalarGridSpec(
            num_scalar_prefetch=0,
            grid=(G,),
            in_specs=in_specs,
            out_specs=out_specs,
        ),
        compiler_params=pltpu.CompilerParams(
            dimension_semantics=("parallel",),
            vmem_limit_bytes=32 << 20,
        ),
    )(*inputs)

    # Final tiny reduction + negation in the wrapper.
    return -jnp.sum(partials)


def _reference_loss(nn_output, target, target_next=None, gamma=5.0):
    """Pure-JAX transcription of the PyTorch module (extra_node=False)."""
    nn_output = nn_output.astype(jnp.float32)
    tgt = jnp.abs(target.astype(jnp.float32))
    if target_next is None:
        target_next = jnp.zeros_like(tgt)
    tnx = jnp.abs(target_next.astype(jnp.float32))
    signs = jnp.tanh(gamma * nn_output)
    s = jnp.sum(jnp.abs(nn_output), axis=(1, 2))
    v_i_caps = jnp.abs(nn_output) / s[:, None, None]
    return -jnp.sum(v_i_caps * (tnx - tgt) * signs)


if __name__ == "__main__":
    key = jax.random.PRNGKey(0)
    k1, k2, k3 = jax.random.split(key, 3)

    B, S, F = 8, 16, 16
    nn_output = jax.random.normal(k1, (B, S, F), dtype=jnp.float32)
    target = jax.random.normal(k2, (B, S, F), dtype=jnp.float32)
    target_next = jax.random.normal(k3, (B, S, F), dtype=jnp.float32)

    # Default path (target_next = zeros, gamma = 5): only two input streams.
    loss = jax.block_until_ready(soft_stock_loss(nn_output, target))
    ref = jax.block_until_ready(_reference_loss(nn_output, target))
    assert jnp.isfinite(loss), f"non-finite loss: {loss}"
    assert jnp.allclose(loss, ref, rtol=1e-4, atol=1e-5), f"{loss} vs {ref}"

    # Explicit target_next + custom gamma path (three input streams).
    loss2 = jax.block_until_ready(
        soft_stock_loss(nn_output, target, target_next=target_next, gamma=3.0))
    ref2 = jax.block_until_ready(
        _reference_loss(nn_output, target, target_next=target_next, gamma=3.0))
    assert jnp.isfinite(loss2), f"non-finite loss: {loss2}"
    assert jnp.allclose(loss2, ref2, rtol=1e-4, atol=1e-5), f"{loss2} vs {ref2}"

    # bf16 inputs pass straight through (halves HBM bytes); compute stays f32.
    nn_bf16 = nn_output.astype(jnp.bfloat16)
    tgt_bf16 = target.astype(jnp.bfloat16)
    loss3 = jax.block_until_ready(soft_stock_loss(nn_bf16, tgt_bf16))
    ref3 = jax.block_until_ready(_reference_loss(nn_bf16, tgt_bf16))
    assert jnp.isfinite(loss3), f"non-finite loss: {loss3}"
    assert jnp.allclose(loss3, ref3, rtol=1e-3, atol=1e-3), f"{loss3} vs {ref3}"

    print("KERNEL_OK")
</pallas_src>

<mosaic_0001>
module attributes {stable_mosaic.version = 11 : i64} {
  func.func @kernel(%arg0: i32, %arg1: memref<2x16x16xf32, #tpu.memory_space<vmem>>, %arg2: memref<2x16x16xf32, #tpu.memory_space<vmem>>, %arg3: memref<1x1x1xf32, #tpu.memory_space<vmem>>) attributes {dimension_semantics = [#tpu.dimension_semantics<parallel>], iteration_bounds = array<i64: 4>, scalar_prefetch = 0 : i64, scratch_operands = 0 : i64, tpu.core_type = #tpu.core_type<tc>, window_params = [{transform_indices = @transform_0, window_bounds = array<i64: 2, 16, 16>}, {transform_indices = @transform_1, window_bounds = array<i64: 2, 16, 16>}, {transform_indices = @transform_2, window_bounds = array<i64: 1, 1, 1>}]} {
    %c0 = arith.constant 0 : index
    %c0_0 = arith.constant 0 : index
    %c0_1 = arith.constant 0 : index
    %0 = vector.load %arg1[%c0, %c0_0, %c0_1] : memref<2x16x16xf32, #tpu.memory_space<vmem>>, vector<2x16x16xf32>
    %c0_2 = arith.constant 0 : index
    %c0_3 = arith.constant 0 : index
    %c0_4 = arith.constant 0 : index
    %1 = vector.load %arg2[%c0_2, %c0_3, %c0_4] : memref<2x16x16xf32, #tpu.memory_space<vmem>>, vector<2x16x16xf32>
    %2 = math.absf %1 : vector<2x16x16xf32>
    %cst = arith.constant 0.000000e+00 : f32
    %3 = vector.broadcast %cst : f32 to vector<2x16x16xf32>
    %4 = arith.subf %3, %2 : vector<2x16x16xf32>
    %5 = math.absf %0 : vector<2x16x16xf32>
    %cst_5 = arith.constant 5.000000e+00 : f32
    %6 = vector.broadcast %cst_5 : f32 to vector<2x16x16xf32>
    %7 = arith.mulf %6, %0 : vector<2x16x16xf32>
    %8 = math.tanh %7 : vector<2x16x16xf32>
    %9 = arith.mulf %5, %8 : vector<2x16x16xf32>
    %10 = arith.mulf %9, %4 : vector<2x16x16xf32>
    %cst_6 = arith.constant dense<0.000000e+00> : vector<2x16xf32>
    %11 = vector.multi_reduction <add>, %10, %cst_6 [2] : vector<2x16x16xf32> to vector<2x16xf32>
    %cst_7 = arith.constant dense<0.000000e+00> : vector<2xf32>
    %12 = vector.multi_reduction <add>, %11, %cst_7 [1] : vector<2x16xf32> to vector<2xf32>
    %13 = vector.shape_cast %12 : vector<2xf32> to vector<2x1xf32>
    %cst_8 = arith.constant dense<0.000000e+00> : vector<2x16xf32>
    %14 = vector.multi_reduction <add>, %5, %cst_8 [2] : vector<2x16x16xf32> to vector<2x16xf32>
    %cst_9 = arith.constant dense<0.000000e+00> : vector<2xf32>
    %15 = vector.multi_reduction <add>, %14, %cst_9 [1] : vector<2x16xf32> to vector<2xf32>
    %16 = vector.shape_cast %15 : vector<2xf32> to vector<2x1xf32>
    %17 = arith.divf %13, %16 : vector<2x1xf32>
    %cst_10 = arith.constant dense<0.000000e+00> : vector<1xf32>
    %18 = vector.multi_reduction <add>, %17, %cst_10 [0] : vector<2x1xf32> to vector<1xf32>
    %19 = vector.shape_cast %18 : vector<1xf32> to vector<1x1xf32>
    %20 = vector.shape_cast %19 : vector<1x1xf32> to vector<1x1x1xf32>
    %c0_11 = arith.constant 0 : index
    %c0_12 = arith.constant 0 : index
    %c0_13 = arith.constant 0 : index
    %21 = vector.load %arg3[%c0_11, %c0_12, %c0_13] : memref<1x1x1xf32, #tpu.memory_space<vmem>>, vector<1x1x1xf32>
    tpu.vector_store %arg3[%c0_11, %c0_12, %c0_13], %20 {strides = array<i32>} : memref<1x1x1xf32, #tpu.memory_space<vmem>>, vector<1x1x1xf32>,
    return
  }
  func.func @transform_0(%arg0: i32) -> (i32, i32, i32) {
    %c0_i32 = arith.constant 0 : i32
    %c0_i32_0 = arith.constant 0 : i32
    %c0_i32_1 = arith.constant 0 : i32
    return %arg0, %c0_i32, %c0_i32_0 : i32, i32, i32
  }
  func.func @transform_1(%arg0: i32) -> (i32, i32, i32) {
    %c0_i32 = arith.constant 0 : i32
    %c0_i32_0 = arith.constant 0 : i32
    %c0_i32_1 = arith.constant 0 : i32
    return %arg0, %c0_i32, %c0_i32_0 : i32, i32, i32
  }
  func.func @transform_2(%arg0: i32) -> (i32, i32, i32) {
    %c0_i32 = arith.constant 0 : i32
    %c0_i32_0 = arith.constant 0 : i32
    %c0_i32_1 = arith.constant 0 : i32
    return %arg0, %c0_i32, %c0_i32_0 : i32, i32, i32
  }
}

</mosaic_0001>

<llo_original>
// kernel: tpu_custom_call.1
$region0: #{tpu_custom_call.1}
  #allocation0 [shape = 'u32[]', space=smem, size = 0x4, offset = 0x4, fixed_abs, tag = 'smem constant byte address 0x4 - core index']
  #allocation1 [shape = 'u32[144,128]{1,0:T(1,128)}', space=vmem, size = 0x12000, scoped, tag = 'internal scratch']
  %s0 = inlined_call_operand.hbm [shape: f32[8,16,16], index: 0, kind: input, shape index: {}]
  %s1 = inlined_call_operand.hbm [shape: f32[8,16,16], index: 1, kind: input, shape index: {}]
  %s2 = inlined_call_operand.vmem [shape: f32[4,1,1], index: 2, kind: output, shape index: {}]
  %s3 = sld [smem:[#allocation0]]
  $region49: #{tpu_custom_call.1} parent=0
    _
  %s5 = ssub.s32 1, %s3
  %s6 = scalar_select 0, %s5, %s3
  $region1: #{tpu_custom_call.1} parent=0
    #allocation2 [shape = 'u8[32768]{0}', space=vmem, size = 0x8000, scoped, tag = 'input window, operand 0']
    #allocation3 [shape = 's32[2]{0}', space=sflag, size = 0x8, scoped, tag = 'scoped memory for tpu_custom_call.1']
    #allocation4 [shape = 'u8[32768]{0}', space=vmem, size = 0x8000, scoped, tag = 'input window, operand 1']
    #allocation5 [shape = 's32[2]{0}', space=sflag, size = 0x8, scoped, tag = 'scoped memory for tpu_custom_call.1']
    %7 = vsyncpa [#allocation3], 0
    %s8 = scalar_lea.sflag [#allocation3], 1
    %9 = vsyncpa %s8, 0
    %10 = vsyncpa [#allocation5], 0
    %s11 = scalar_lea.sflag [#allocation5], 1
    %12 = vsyncpa %s11, 0
    loop: start=0, step=1, limit=6
    $region2: #{tpu_custom_call.1} parent=1 // loop_pre_header
      _
    $region3: #{tpu_custom_call.1} parent=1 // loop_header
      %s14 = sphi 0, %s18
      %p15 = scmp.ge.s32.totalorder %s14, 6
      %s24 = sphi 0, %s26
      %s27 = sphi 0, %s24
      %s28 = sphi 0, %s27
      %s44 = sphi 0, %s28
      %s50 = sphi 0, %s52
      %s53 = sphi 0, %s50
      %s54 = sphi 0, %s53
      %s70 = sphi 0, %s54
      %s76 = sphi 0, %s78
      %s79 = sphi 0, %s76
      %s80 = sphi 0, %s79
      %s96 = sphi 0, %s80
    $region4: #{tpu_custom_call.1} parent=1 // loop_header_branch
      %17 = sbr.rel (%p15) target = $region8
    $region5: #{tpu_custom_call.1} parent=1 // loop_body
      %s19 = ssub.s32 %s14, 1
      %s20 = ssub.s32 %s14, 2
      %s21 = sadd.s32 %s14, 1
      %s22 = ssub.s32 %s14, %s21
      %p23 = scmp.eq.s32.totalorder %s22, 0
      %s25 = sadd.s32 %s24, 1
      %s26 = scalar_select %p23, %s24, %s25
      %p29 = pneg %p23
      %p30 = scmp.eq.s32.totalorder %s14, 3
      %p31 = por %p29, %p30
      %p32 = scmp.ne.s32.totalorder %s24, %s27
      %p33 = scmp.eq.s32.totalorder %s14, 0
      %p34 = por %p32, %p33
      %p35 = scmp.ne.s32.totalorder %s24, %s27
      %p36 = scmp.eq.s32.totalorder %s19, 3
      %p37 = por %p35, %p36
      %p38 = scmp.ne.s32.totalorder %s27, %s28
      %p39 = scmp.eq.s32.totalorder %s19, 0
      %p40 = por %p38, %p39
      %p41 = scmp.ne.s32.totalorder %s27, %s28
      %p42 = scmp.eq.s32.totalorder %s20, 3
      %p43 = por %p41, %p42
      %p45 = scmp.ne.s32.totalorder %s28, %s44
      %p46 = scmp.eq.s32.totalorder %s20, 0
      %p47 = por %p45, %p46
      %s48 = ssub.s32 %s14, %s21
      %p49 = scmp.eq.s32.totalorder %s48, 0
      %s51 = sadd.s32 %s50, 1
      %s52 = scalar_select %p49, %s50, %s51
      %p55 = pneg %p49
      %p56 = scmp.eq.s32.totalorder %s14, 3
      %p57 = por %p55, %p56
      %p58 = scmp.ne.s32.totalorder %s50, %s53
      %p59 = scmp.eq.s32.totalorder %s14, 0
      %p60 = por %p58, %p59
      %p61 = scmp.ne.s32.totalorder %s50, %s53
      %p62 = scmp.eq.s32.totalorder %s19, 3
      %p63 = por %p61, %p62
      %p64 = scmp.ne.s32.totalorder %s53, %s54
      %p65 = scmp.eq.s32.totalorder %s19, 0
      %p66 = por %p64, %p65
      %p67 = scmp.ne.s32.totalorder %s53, %s54
      %p68 = scmp.eq.s32.totalorder %s20, 3
      %p69 = por %p67, %p68
      %p71 = scmp.ne.s32.totalorder %s54, %s70
      %p72 = scmp.eq.s32.totalorder %s20, 0
      %p73 = por %p71, %p72
      %s74 = ssub.s32 %s14, %s21
      %p75 = scmp.eq.s32.totalorder %s74, 0
      %s77 = sadd.s32 %s76, 1
      %s78 = scalar_select %p75, %s76, %s77
      %p81 = pneg %p75
      %p82 = scmp.eq.s32.totalorder %s14, 3
      %p83 = por %p81, %p82
      %p84 = scmp.ne.s32.totalorder %s76, %s79
      %p85 = scmp.eq.s32.totalorder %s14, 0
      %p86 = por %p84, %p85
      %p87 = scmp.ne.s32.totalorder %s76, %s79
      %p88 = scmp.eq.s32.totalorder %s19, 3
      %p89 = por %p87, %p88
      %p90 = scmp.ne.s32.totalorder %s79, %s80
      %p91 = scmp.eq.s32.totalorder %s19, 0
      %p92 = por %p90, %p91
      %p93 = scmp.ne.s32.totalorder %s79, %s80
      %p94 = scmp.eq.s32.totalorder %s20, 3
      %p95 = por %p93, %p94
      %p97 = scmp.ne.s32.totalorder %s80, %s96
      %p98 = scmp.eq.s32.totalorder %s20, 0
      %p99 = por %p97, %p98
      %p100 = scmp.le.s32.totalorder 1, %s14
      %p101 = scmp.lt.s32.totalorder %s14, 5
      %p102 = pnand %p100, %p101
      %p103 = pneg %p102
      // Predicated region
      $region9: #{tpu_custom_call.1} parent=5 // pred_check
        _
      $region10: #{tpu_custom_call.1} parent=5 // pred_check_branch
        %105 = sbr.rel (%p102) target = $region12
      $region11: #{tpu_custom_call.1} parent=5 // pred_region
        %s106 = ssub.s32 %s14, 1
      $region12: #{tpu_custom_call.1} parent=5 // pred_fallthru
        _
      %p107 = scmp.lt.s32.totalorder %s14, 4
      // Predicated region
      $region13: #{tpu_custom_call.1} parent=5 // pred_check
        %p108 = pneg %p107
      $region14: #{tpu_custom_call.1} parent=5 // pred_check_branch
        %110 = sbr.rel (%p108) target = $region16
      $region15: #{tpu_custom_call.1} parent=5 // pred_region
        // Predicated region
        $region17: #{tpu_custom_call.1} parent=15 // pred_check
          %p111 = pneg %p34
        $region18: #{tpu_custom_call.1} parent=15 // pred_check_branch
          %113 = sbr.rel (%p111) target = $region20
        $region19: #{tpu_custom_call.1} parent=15 // pred_region
          %s114 = sand.u32 %s24, 1
          %s115 = scalar_lea.sflag [#allocation3], %s114
          %s116 = sand.u32 %s24, 1
          %s117 = smul.addr %s116, 32
          %s118 = scalar_lea.vmem [#allocation2], %s117
          %s119 = smul.u32 2, %s14
          %s121 = ssub.s32 512, 512
          %122 = vsyncadd %s115, %s121
          %s123 = smul.addr %s119, 2
          %s124 = smul.addr %s123, 128
          %s125 = scalar_lea.hbm %s0, %s124
          %s126 = sshll.u32 %s118, 4
          %s127 = int_to_ptr.vmem [resolvable:$true] %s126
          %132 = dma.hbm_to_vmem [thread:$0]  %s125, 512, %s127, %s115, 128, 128, 8
        $region20: #{tpu_custom_call.1} parent=15 // pred_fallthru
          _
        // Predicated region
        $region21: #{tpu_custom_call.1} parent=15 // pred_check
          %p133 = pneg %p60
        $region22: #{tpu_custom_call.1} parent=15 // pred_check_branch
          %135 = sbr.rel (%p133) target = $region24
        $region23: #{tpu_custom_call.1} parent=15 // pred_region
          %s136 = sand.u32 %s50, 1
          %s137 = scalar_lea.sflag [#allocation5], %s136
          %s138 = sand.u32 %s50, 1
          %s139 = smul.addr %s138, 32
          %s140 = scalar_lea.vmem [#allocation4], %s139
          %s141 = smul.u32 2, %s14
          %s143 = ssub.s32 512, 512
          %144 = vsyncadd %s137, %s143
          %s145 = smul.addr %s141, 2
          %s146 = smul.addr %s145, 128
          %s147 = scalar_lea.hbm %s1, %s146
          %s148 = sshll.u32 %s140, 4
          %s149 = int_to_ptr.vmem [resolvable:$true] %s148
          %154 = dma.hbm_to_vmem [thread:$0]  %s147, 512, %s149, %s137, 128, 128, 8
        $region24: #{tpu_custom_call.1} parent=15 // pred_fallthru
          _
      $region16: #{tpu_custom_call.1} parent=5 // pred_fallthru
        _
      %p155 = scmp.le.s32.totalorder 1, %s14
      %p156 = scmp.lt.s32.totalorder %s14, 5
      %p157 = pnand %p155, %p156
      %p158 = pneg %p157
      // Predicated region
      $region25: #{tpu_custom_call.1} parent=5 // pred_check
        _
      $region26: #{tpu_custom_call.1} parent=5 // pred_check_branch
        %160 = sbr.rel (%p157) target = $region28
      $region27: #{tpu_custom_call.1} parent=5 // pred_region
        %s161 = ssub.s32 %s14, 1
        %s162 = sand.u32 %s27, 1
        %s163 = scalar_lea.sflag [#allocation3], %s162
        %s164 = sand.u32 %s27, 1
        %s165 = smul.addr %s164, 32
        %s166 = scalar_lea.vmem [#allocation2], %s165
        // Predicated region
        $region29: #{tpu_custom_call.1} parent=27 // pred_check
          %p167 = pneg %p40
        $region30: #{tpu_custom_call.1} parent=27 // pred_check_branch
          %169 = sbr.rel (%p167) target = $region32
        $region31: #{tpu_custom_call.1} parent=27 // pred_region
          %170 = dma.done %s163, 512
        $region32: #{tpu_custom_call.1} parent=27 // pred_fallthru
          _
        %s171 = sand.u32 %s53, 1
        %s172 = scalar_lea.sflag [#allocation5], %s171
        %s173 = sand.u32 %s53, 1
        %s174 = smul.addr %s173, 32
        %s175 = scalar_lea.vmem [#allocation4], %s174
        // Predicated region
        $region33: #{tpu_custom_call.1} parent=27 // pred_check
          %p176 = pneg %p66
        $region34: #{tpu_custom_call.1} parent=27 // pred_check_branch
          %178 = sbr.rel (%p176) target = $region36
        $region35: #{tpu_custom_call.1} parent=27 // pred_region
          %179 = dma.done %s172, 512
        $region36: #{tpu_custom_call.1} parent=27 // pred_fallthru
          _
        %s180 = sand.u32 %s27, 1
        %s181 = scalar_lea.sflag [#allocation3], %s180
        %s182 = sand.u32 %s27, 1
        %s183 = smul.addr %s182, 32
        %s184 = scalar_lea.vmem [#allocation2], %s183
        %p185 = pneg %p40
        %p186 = pneg %p37
        %s187 = sand.u32 %s53, 1
        %s188 = scalar_lea.sflag [#allocation5], %s187
        %s189 = sand.u32 %s53, 1
        %s190 = smul.addr %s189, 32
        %s191 = scalar_lea.vmem [#allocation4], %s190
        %p192 = pneg %p66
        %p193 = pneg %p63
        %p194 = pneg %p92
        %p195 = pneg %p89
        %p196 = scmp.lt.s32.totalorder %s19, 3
        %s197 = scalar_select %p196, %s19, 3
        %s198 = scalar_lea.vmem %s2, %s197
        %s199 = smul.u32 2, %s19
        %s200 = smul.u32 2, %s19
        %p201 = scmp.lt.s32.totalorder %s19, 3
        %s202 = scalar_select %p201, %s19, 3
        %s203 = scalar_lea.vmem %s2, %s202
        %v204 = vld [vmem:[%s166] sm:$0xff]
        %v205 = vld [vmem:[%s166 + $0x8] sm:$0xff]
        %v206 = vld [vmem:[%s166 + $0x10] sm:$0xff]
        %v207 = vld [vmem:[%s166 + $0x18] sm:$0xff]
        %v208 = vld [vmem:[%s175] sm:$0xff]
        %v209 = vld [vmem:[%s175 + $0x8] sm:$0xff]
        %v210 = vld [vmem:[%s175 + $0x10] sm:$0xff]
        %v211 = vld [vmem:[%s175 + $0x18] sm:$0xff]
        %v212 = vand.u32 2147483647, %v208
        %v213 = vand.u32 2147483647, %v209
        %v214 = vand.u32 2147483647, %v210
        %v215 = vand.u32 2147483647, %v211
        %v216 = vsub.f32 0.0, %v212
        %v217 = vsub.f32 0.0, %v213
        %v218 = vsub.f32 0.0, %v214
        %v219 = vsub.f32 0.0, %v215
        %v220 = vand.u32 2147483647, %v204
        %v221 = vand.u32 2147483647, %v205
        %v222 = vand.u32 2147483647, %v206
        %v223 = vand.u32 2147483647, %v207
        %v224 = vmul.f32 %v204, 5.0
        %v225 = vmul.f32 %v205, 5.0
        %v226 = vmul.f32 %v206, 5.0
        %v227 = vmul.f32 %v207, 5.0
        %v228 = vtanh.pop %v224
        %v229 = vtanh.pop %v225
        %v230 = vtanh.pop %v226
        %v231 = vtanh.pop %v227
        %v232 = vmul.f32 %v220, %v228
        %v233 = vmul.f32 %v221, %v229
        %v234 = vmul.f32 %v222, %v230
        %v235 = vmul.f32 %v223, %v231
        %v236 = vmul.f32 %v232, %v216
        %v237 = vmul.f32 %v233, %v217
        %v238 = vmul.f32 %v234, %v218
        %v239 = vmul.f32 %v235, %v219
        %vm240 = vcmask 130048
        %v241 = vsel %vm240, %v236, 0.0
        %242 = vadd.xlane.f32.xlu0 %v241
        %v243 = vpop.xlane.xlu0 %242
        %v244 = vsel %vm240, %v237, 0.0
        %245 = vadd.xlane.f32.xlu0 %v244
        %v246 = vpop.xlane.xlu0 %245
        %v247 = vsel %vm240, %v238, 0.0
        %248 = vadd.xlane.f32.xlu0 %v247
        %v249 = vpop.xlane.xlu0 %248
        %v250 = vsel %vm240, %v239, 0.0
        %251 = vadd.xlane.f32.xlu0 %v250
        %v252 = vpop.xlane.xlu0 %251
        %v257 = vlaneseq
        %v258 = vand.u32 %v257, 127
        %v259 = vlaneseq
        %v260 = vshrl.u32 %v259, 7
        %v261 = vsub.s32 %v258, %v260
        %v262 = vrot.slane %v243, %v261
        %v263 = vadd.s32 %v258, 4294967288
        %v264 = vlaneseq
        %v265 = vshrl.u32 %v264, 7
        %v266 = vsub.s32 %v263, %v265
        %v267 = vrot.slane %v246, %v266
        %vm268 = vcmask 130112
        %v269 = vsel %vm268, %v267, %v262
        %v270 = vlaneseq
        %v271 = vshrl.u32 %v270, 7
        %v272 = vsub.s32 %v258, %v271
        %v273 = vrot.slane %v249, %v272
        %v274 = vlaneseq
        %v275 = vshrl.u32 %v274, 7
        %v276 = vsub.s32 %v263, %v275
        %v277 = vrot.slane %v252, %v276
        %v278 = vsel %vm268, %v277, %v273
        %vm279 = vcmask 1041409
        %v280 = vsel %vm279, %v278, %v269
        %vm282 = vcmask 123904
        %v283 = vsel %vm282, %v280, 0.0
        %284 = vadd.xlane.f32.xlu0 %v283
        %v285 = vpop.xlane.xlu0 %284
        %v286 = vsel %vm240, %v220, 0.0
        %287 = vadd.xlane.f32.xlu0 %v286
        %v288 = vpop.xlane.xlu0 %287
        %v289 = vsel %vm240, %v221, 0.0
        %290 = vadd.xlane.f32.xlu0 %v289
        %v291 = vpop.xlane.xlu0 %290
        %v292 = vsel %vm240, %v222, 0.0
        %293 = vadd.xlane.f32.xlu0 %v292
        %v294 = vpop.xlane.xlu0 %293
        %v295 = vsel %vm240, %v223, 0.0
        %296 = vadd.xlane.f32.xlu0 %v295
        %v297 = vpop.xlane.xlu0 %296
        %v302 = vlaneseq
        %v303 = vshrl.u32 %v302, 7
        %v304 = vsub.s32 %v258, %v303
        %v305 = vrot.slane %v288, %v304
        %v306 = vlaneseq
        %v307 = vshrl.u32 %v306, 7
        %v308 = vsub.s32 %v263, %v307
        %v309 = vrot.slane %v291, %v308
        %v310 = vsel %vm268, %v309, %v305
        %v311 = vlaneseq
        %v312 = vshrl.u32 %v311, 7
        %v313 = vsub.s32 %v258, %v312
        %v314 = vrot.slane %v294, %v313
        %v315 = vlaneseq
        %v316 = vshrl.u32 %v315, 7
        %v317 = vsub.s32 %v263, %v316
        %v318 = vrot.slane %v297, %v317
        %v319 = vsel %vm268, %v318, %v314
        %v320 = vsel %vm279, %v319, %v310
        %v322 = vsel %vm282, %v320, 0.0
        %323 = vadd.xlane.f32.xlu0 %v322
        %v324 = vpop.xlane.xlu0 %323
        %v325 = vrcp.pop %v324
        %v326 = vmul.f32 %v285, %v325
        %vm327 = vcmask 1041408
        %v328 = vsel %vm327, %v326, 0.0
        %v329 = vrot.slane %v328, 4
        %v330 = vadd.f32 %v328, %v329
        %v331 = vrot.slane %v330, 2
        %v332 = vadd.f32 %v330, %v331
        %v333 = vrot.slane %v332, 1
        %v334 = vadd.f32 %v332, %v333
        %vm335 = vcmask 0
        %336 = vst.msk [vmem:[%s203] sm:$0x1] %vm335, %v334
        %p337 = scmp.lt.s32.totalorder %s19, 3
        %s338 = scalar_select %p337, %s19, 3
        %s339 = scalar_lea.vmem %s2, %s338
        // Predicated region
        $region37: #{tpu_custom_call.1} parent=27 // pred_check
          %p340 = pneg %p89
        $region38: #{tpu_custom_call.1} parent=27 // pred_check_branch
          %342 = sbr.rel (%p340) target = $region40
        $region39: #{tpu_custom_call.1} parent=27 // pred_region
          _
        $region40: #{tpu_custom_call.1} parent=27 // pred_fallthru
          _
      $region28: #{tpu_custom_call.1} parent=5 // pred_fallthru
        _
      %p343 = scmp.le.s32.totalorder 2, %s14
      // Predicated region
      $region41: #{tpu_custom_call.1} parent=5 // pred_check
        %p344 = pneg %p343
      $region42: #{tpu_custom_call.1} parent=5 // pred_check_branch
        %346 = sbr.rel (%p344) target = $region44
      $region43: #{tpu_custom_call.1} parent=5 // pred_region
        %s347 = ssub.s32 %s14, 2
        // Predicated region
        $region45: #{tpu_custom_call.1} parent=43 // pred_check
          %p348 = pneg %p95
        $region46: #{tpu_custom_call.1} parent=43 // pred_check_branch
          %350 = sbr.rel (%p348) target = $region48
        $region47: #{tpu_custom_call.1} parent=43 // pred_region
          %p351 = scmp.lt.s32.totalorder %s20, 3
          %s352 = scalar_select %p351, %s20, 3
          %s353 = scalar_lea.vmem %s2, %s352
        $region48: #{tpu_custom_call.1} parent=43 // pred_fallthru
          _
      $region44: #{tpu_custom_call.1} parent=5 // pred_fallthru
        _
    $region6: #{tpu_custom_call.1} parent=1 // loop_footer
      %s18 = sadd.s32 1, %s14
    $region7: #{tpu_custom_call.1} parent=1 // loop_footer_branch
      %13 = sbr.rel target = $region3
    $region8: #{tpu_custom_call.1} parent=1 // loop_exit
      _
    %354 = vsyncpa [#allocation3], 1
    %s355 = scalar_lea.sflag [#allocation3], 1
    %356 = vsyncpa %s355, 1
    %357 = vsyncpa [#allocation5], 1
    %s358 = scalar_lea.sflag [#allocation5], 1
    %359 = vsyncpa %s358, 1

</llo_original>
